<compile_context>
chip_gen: v7x
topology: tpu7x:2x2x1
jax: 0.10.0
libtpu: 0.0.40
codegen_flags: <defaults>
</compile_context>

<pallas_src>
import functools

import jax
import jax.numpy as jnp
from jax.experimental import pallas as pl
from jax.experimental.pallas import tpu as pltpu

_LANES = 128
_SUBLANES = 8


def _round_up(n, m):
    return ((n + m - 1) // m) * m


def _round_down(n, m):
    return (n // m) * m


def _cdiv(a, b):
    return -(-a // b)


def _feature_embedding_kernel(x_ref, w1_ref, b1_ref, w2_ref, b2_ref, o_ref, *,
                              transpose_out, out_rows):
    # hidden = relu(x @ W1 + b1): bf16 MXU matmul, f32 accumulation; bias-add
    # and ReLU stay in f32 on the VPU.
    h = jnp.dot(x_ref[...], w1_ref[...], preferred_element_type=jnp.float32)
    h = jnp.maximum(h + b1_ref[...], 0.0)
    # out = hidden @ W2 + b2 (cast hidden to bf16 for the second MXU pass).
    o = jnp.dot(h.astype(w2_ref.dtype), w2_ref[...],
                preferred_element_type=jnp.float32)
    o = o + b2_ref[...]                       # (tb, out_p) f32, cols [0, out_dim) valid
    if transpose_out:
        # Lane-dense writeback: keep only the real feature columns and store
        # them transposed as (out_rows, tb).  The transpose runs on the XLU
        # (separate issue slot -> hidden under the HBM-bound DMA), and the
        # output HBM stream shrinks by out_p / out_rows.
        o_t = jnp.transpose(o)                # (out_p, tb)
        o_ref[...] = o_t[:out_rows, :].astype(o_ref.dtype)
    else:
        o_ref[...] = o.astype(o_ref.dtype)


def feature_embedding(x, w1, b1, w2, b2, *, block_b=4096,
                      compute_dtype=jnp.bfloat16):
    """Fused MLP: relu(x @ w1 + b1) @ w2 + b2  (FeatureEmbedding.forward).

    x : (B, input_dim)
    w1: (input_dim, hidden_dim)   b1: (1, hidden_dim) or (hidden_dim,)
    w2: (hidden_dim, output_dim)  b2: (1, output_dim) or (output_dim,)
    """
    B, in_dim = x.shape
    hid_dim = w1.shape[1]
    out_dim = w2.shape[1]
    out_dtype = x.dtype

    # Lane-dense padding of hidden / output feature dims for the MXU (weights
    # are tiny and resident, so padding them is free; padded cols are zeros).
    hid_p = _round_up(hid_dim, _LANES)
    out_p = _round_up(out_dim, _LANES)

    # Transposed lane-dense output whenever the natural (tb, out_p) store would
    # be mostly lane padding.
    transpose_out = out_dim < _LANES
    out_rows = _round_up(out_dim, _SUBLANES) if transpose_out else out_p

    # Batch tile: multiple of 128 on the transposed path (clean 128x128 XLU
    # transposes + (8,128) rule), else multiple of 8; as large as block_b
    # allows (feature dims are tiny, so VMEM stays cheap).
    align = _LANES if transpose_out else _SUBLANES
    tb = max(align, min(_round_down(block_b, align), _round_up(B, align)))
    n_tiles = _cdiv(B, tb)
    # Megacore (v7x): make sure there are >= 2 grid steps to shard across TCs.
    if n_tiles == 1 and B > align:
        tb = max(align, _round_up(_cdiv(B, 2), align))
        n_tiles = _cdiv(B, tb)
    b_virt = n_tiles * tb

    # Cast MXU operands to bf16; biases stay f32 for the f32 VPU epilogue.
    xp = x.astype(compute_dtype)
    if B < tb:
        # Only for tiny B (< one tile).  Large B uses a ragged last tile
        # instead of a full HBM pad copy of x.
        xp = jnp.pad(xp, ((0, tb - B), (0, 0)))

    w1p = jnp.pad(w1, ((0, 0), (0, hid_p - hid_dim))).astype(compute_dtype)
    b1p = jnp.pad(jnp.reshape(b1, (1, -1)).astype(jnp.float32),
                  ((0, 0), (0, hid_p - hid_dim)))
    w2p = jnp.pad(w2, ((0, hid_p - hid_dim), (0, out_p - out_dim))).astype(compute_dtype)
    b2p = jnp.pad(jnp.reshape(b2, (1, -1)).astype(jnp.float32),
                  ((0, 0), (0, out_p - out_dim)))

    if transpose_out:
        out_shape = jax.ShapeDtypeStruct((out_rows, b_virt), compute_dtype)
        out_spec = pl.BlockSpec((out_rows, tb), lambda i: (0, i))
        out_bytes = b_virt * out_rows * jnp.dtype(compute_dtype).itemsize
    else:
        out_shape = jax.ShapeDtypeStruct((b_virt, out_p), compute_dtype)
        out_spec = pl.BlockSpec((tb, out_p), lambda i: (i, 0))
        out_bytes = b_virt * out_p * jnp.dtype(compute_dtype).itemsize

    kernel = functools.partial(_feature_embedding_kernel,
                               transpose_out=transpose_out, out_rows=out_rows)

    cost = pl.CostEstimate(
        flops=2 * b_virt * (in_dim * hid_p + hid_p * out_p),
        transcendentals=0,
        bytes_accessed=(xp.size * xp.dtype.itemsize
                        + w1p.size * w1p.dtype.itemsize
                        + w2p.size * w2p.dtype.itemsize
                        + (b1p.size + b2p.size) * 4
                        + out_bytes),
    )

    out = pl.pallas_call(
        kernel,
        out_shape=out_shape,
        grid=(n_tiles,),
        in_specs=[
            pl.BlockSpec((tb, in_dim), lambda i: (i, 0)),     # x: streamed tiles
            pl.BlockSpec((in_dim, hid_p), lambda i: (0, 0)),  # w1: resident
            pl.BlockSpec((1, hid_p), lambda i: (0, 0)),       # b1: resident
            pl.BlockSpec((hid_p, out_p), lambda i: (0, 0)),   # w2: resident
            pl.BlockSpec((1, out_p), lambda i: (0, 0)),       # b2: resident
        ],
        out_specs=out_spec,
        compiler_params=pltpu.CompilerParams(
            dimension_semantics=("parallel",),      # megacore sharding on v7x
            vmem_limit_bytes=32 * 1024 * 1024,      # right-sized (< v7x 64 MiB)
        ),
        cost_estimate=cost,
    )(xp, w1p, b1p, w2p, b2p)

    if transpose_out:
        # Undo the lane-dense transposed layout on the compact result.
        return jnp.transpose(out[:out_dim, :B]).astype(out_dtype)
    return out[:B, :out_dim].astype(out_dtype)


def _torch_linear_init(key, fan_in, fan_out, dtype=jnp.float32):
    """Deterministic init mimicking nn.Linear's U(-1/sqrt(fan_in), 1/sqrt(fan_in))."""
    kw, kb = jax.random.split(key)
    bound = 1.0 / jnp.sqrt(jnp.asarray(fan_in, dtype))
    # Stored as (in, out), i.e. transpose of torch's (out, in) weight.
    w = jax.random.uniform(kw, (fan_in, fan_out), dtype, -bound, bound)
    b = jax.random.uniform(kb, (1, fan_out), dtype, -bound, bound)
    return w, b


if __name__ == "__main__":
    # Small shapes consistent with the module's forward: x is (batch, input_dim).
    batch, input_dim, hidden_dim, output_dim = 8, 16, 32, 16

    key = jax.random.PRNGKey(0)
    kx, k1, k2 = jax.random.split(key, 3)

    x = jax.random.normal(kx, (batch, input_dim), jnp.float32)
    w1, b1 = _torch_linear_init(k1, input_dim, hidden_dim)
    w2, b2 = _torch_linear_init(k2, hidden_dim, output_dim)

    out = feature_embedding(x, w1, b1, w2, b2)
    out = jax.block_until_ready(out)

    # Pure-JAX f32 reference (kernel uses bf16 MXU operands and a bf16 output
    # store -> looser tolerance).
    ref = jnp.maximum(x @ w1 + b1, 0.0) @ w2 + b2
    assert out.shape == (batch, output_dim)
    assert jnp.allclose(out, ref, atol=2e-2, rtol=2e-2), (
        float(jnp.max(jnp.abs(out - ref))))

    # TODO(synk): bn1 (BatchNorm1d) exists in __init__ but is unused in forward(); omitted.
    print("KERNEL_OK")
</pallas_src>

<mosaic_0001>
module attributes {stable_mosaic.version = 11 : i64} {
  func.func @_feature_embedding_kernel(%arg0: i32, %arg1: memref<128x16xbf16, #tpu.memory_space<vmem>>, %arg2: memref<16x128xbf16, #tpu.memory_space<vmem>>, %arg3: memref<1x128xf32, #tpu.memory_space<vmem>>, %arg4: memref<128x128xbf16, #tpu.memory_space<vmem>>, %arg5: memref<1x128xf32, #tpu.memory_space<vmem>>, %arg6: memref<16x128xbf16, #tpu.memory_space<vmem>>) attributes {dimension_semantics = [#tpu.dimension_semantics<parallel>], iteration_bounds = array<i64: 1>, scalar_prefetch = 0 : i64, scratch_operands = 0 : i64, tpu.core_type = #tpu.core_type<tc>, window_params = [{transform_indices = @transform_0, window_bounds = array<i64: 128, 16>}, {pipeline_mode = #tpu.pipeline_mode<synchronous>, transform_indices = @transform_1, window_bounds = array<i64: 16, 128>}, {pipeline_mode = #tpu.pipeline_mode<synchronous>, transform_indices = @transform_2, window_bounds = array<i64: 1, 128>}, {pipeline_mode = #tpu.pipeline_mode<synchronous>, transform_indices = @transform_3, window_bounds = array<i64: 128, 128>}, {pipeline_mode = #tpu.pipeline_mode<synchronous>, transform_indices = @transform_4, window_bounds = array<i64: 1, 128>}, {transform_indices = @transform_5, window_bounds = array<i64: 16, 128>}]} {
    %c0 = arith.constant 0 : index
    %c0_0 = arith.constant 0 : index
    %0 = vector.load %arg1[%c0, %c0_0] : memref<128x16xbf16, #tpu.memory_space<vmem>>, vector<128x16xbf16>
    %c0_1 = arith.constant 0 : index
    %c0_2 = arith.constant 0 : index
    %1 = vector.load %arg2[%c0_1, %c0_2] : memref<16x128xbf16, #tpu.memory_space<vmem>>, vector<16x128xbf16>
    %cst = arith.constant dense<0.000000e+00> : vector<128x128xf32>
    %2 = tpu.matmul %0, %1, %cst {dimension_numbers = #tpu.dot_dimension_numbers<[1], [0], [0], [1], [0, 0, 1, 1], [], []>} : vector<128x16xbf16>, vector<16x128xbf16>, vector<128x128xf32> -> vector<128x128xf32>
    %c0_3 = arith.constant 0 : index
    %c0_4 = arith.constant 0 : index
    %3 = vector.load %arg3[%c0_3, %c0_4] : memref<1x128xf32, #tpu.memory_space<vmem>>, vector<1x128xf32>
    %4 = vector.broadcast %3 : vector<1x128xf32> to vector<128x128xf32>
    %5 = arith.addf %2, %4 : vector<128x128xf32>
    %cst_5 = arith.constant 0.000000e+00 : f32
    %6 = vector.broadcast %cst_5 : f32 to vector<128x128xf32>
    %7 = arith.maximumf %5, %6 : vector<128x128xf32>
    %8 = arith.truncf %7 : vector<128x128xf32> to vector<128x128xbf16>
    %c0_6 = arith.constant 0 : index
    %c0_7 = arith.constant 0 : index
    %9 = vector.load %arg4[%c0_6, %c0_7] : memref<128x128xbf16, #tpu.memory_space<vmem>>, vector<128x128xbf16>
    %cst_8 = arith.constant dense<0.000000e+00> : vector<128x128xf32>
    %10 = tpu.matmul %8, %9, %cst_8 {dimension_numbers = #tpu.dot_dimension_numbers<[1], [0], [0], [1], [0, 0, 1, 1], [], []>} : vector<128x128xbf16>, vector<128x128xbf16>, vector<128x128xf32> -> vector<128x128xf32>
    %c0_9 = arith.constant 0 : index
    %c0_10 = arith.constant 0 : index
    %11 = vector.load %arg5[%c0_9, %c0_10] : memref<1x128xf32, #tpu.memory_space<vmem>>, vector<1x128xf32>
    %12 = vector.broadcast %11 : vector<1x128xf32> to vector<128x128xf32>
    %13 = arith.addf %10, %12 : vector<128x128xf32>
    %14 = tpu.transpose %13, [1, 0] : vector<128x128xf32> -> vector<128x128xf32>
    %15 = vector.extract_strided_slice %14 {offsets = [0, 0], sizes = [16, 128], strides = [1, 1]} : vector<128x128xf32> to vector<16x128xf32>
    %16 = arith.truncf %15 : vector<16x128xf32> to vector<16x128xbf16>
    %c0_11 = arith.constant 0 : index
    %c0_12 = arith.constant 0 : index
    %17 = vector.load %arg6[%c0_11, %c0_12] : memref<16x128xbf16, #tpu.memory_space<vmem>>, vector<16x128xbf16>
    tpu.vector_store %arg6[%c0_11, %c0_12], %16 {strides = array<i32>} : memref<16x128xbf16, #tpu.memory_space<vmem>>, vector<16x128xbf16>,
    return
  }
  func.func @transform_0(%arg0: i32) -> (i32, i32) {
    %c0_i32 = arith.constant 0 : i32
    %c0_i32_0 = arith.constant 0 : i32
    return %arg0, %c0_i32 : i32, i32
  }
  func.func @transform_1(%arg0: i32) -> (i32, i32) {
    %c0_i32 = arith.constant 0 : i32
    %c0_i32_0 = arith.constant 0 : i32
    %c0_i32_1 = arith.constant 0 : i32
    return %c0_i32, %c0_i32_0 : i32, i32
  }
  func.func @transform_2(%arg0: i32) -> (i32, i32) {
    %c0_i32 = arith.constant 0 : i32
    %c0_i32_0 = arith.constant 0 : i32
    %c0_i32_1 = arith.constant 0 : i32
    return %c0_i32, %c0_i32_0 : i32, i32
  }
  func.func @transform_3(%arg0: i32) -> (i32, i32) {
    %c0_i32 = arith.constant 0 : i32
    %c0_i32_0 = arith.constant 0 : i32
    %c0_i32_1 = arith.constant 0 : i32
    return %c0_i32, %c0_i32_0 : i32, i32
  }
  func.func @transform_4(%arg0: i32) -> (i32, i32) {
    %c0_i32 = arith.constant 0 : i32
    %c0_i32_0 = arith.constant 0 : i32
    %c0_i32_1 = arith.constant 0 : i32
    return %c0_i32, %c0_i32_0 : i32, i32
  }
  func.func @transform_5(%arg0: i32) -> (i32, i32) {
    %c0_i32 = arith.constant 0 : i32
    %c0_i32_0 = arith.constant 0 : i32
    return %c0_i32, %arg0 : i32, i32
  }
}

</mosaic_0001>

<llo_original>
// kernel: tpu_custom_call.1
$region0: #{tpu_custom_call.1}
  #allocation0 [shape = 'u32[]', space=smem, size = 0x4, offset = 0x4, fixed_abs, tag = 'smem constant byte address 0x4 - core index']
  #allocation1 [shape = 'u32[144,128]{1,0:T(1,128)}', space=vmem, size = 0x12000, scoped, tag = 'internal scratch']
  %s0 = inlined_call_operand.vmem [shape: bf16[128,16], index: 0, kind: input, shape index: {}]
  %s1 = inlined_call_operand.vmem [shape: bf16[16,128], index: 1, kind: input, shape index: {}]
  %s2 = inlined_call_operand.vmem [shape: f32[1,128], index: 2, kind: input, shape index: {}]
  %s3 = inlined_call_operand.vmem [shape: bf16[128,128], index: 3, kind: input, shape index: {}]
  %s4 = inlined_call_operand.vmem [shape: f32[1,128], index: 4, kind: input, shape index: {}]
  %s5 = inlined_call_operand.hbm [shape: bf16[16,128], index: 5, kind: output, shape index: {}]
  %s6 = sld [smem:[#allocation0]]
  $region30: #{tpu_custom_call.1} parent=0
    _
  %s8 = ssub.s32 1, %s6
  %s9 = scalar_select 0, %s8, %s6
  $region1: #{tpu_custom_call.1} parent=0
    #allocation2 [shape = 'u8[4096]{0}', space=vmem, size = 0x1000, scoped, tag = 'output window, operand 0, single buffered']
    #allocation3 [shape = 's32[1]{0}', space=sflag, size = 0x4, scoped, tag = 'scoped memory for tpu_custom_call.1']
    %10 = vsyncpa [#allocation3], 0
    // Predicated region
    $region2: #{tpu_custom_call.1} parent=1 // pred_check
      _
    $region3: #{tpu_custom_call.1} parent=1 // pred_check_branch
      %12 = sbr.rel (0) target = $region5
    $region4: #{tpu_custom_call.1} parent=1 // pred_region
      _
    $region5: #{tpu_custom_call.1} parent=1 // pred_fallthru
      _
    // Predicated region
    $region6: #{tpu_custom_call.1} parent=1 // pred_check
      _
    $region7: #{tpu_custom_call.1} parent=1 // pred_check_branch
      %14 = sbr.rel (0) target = $region9
    $region8: #{tpu_custom_call.1} parent=1 // pred_region
      _
    $region9: #{tpu_custom_call.1} parent=1 // pred_fallthru
      _
    // Predicated region
    $region10: #{tpu_custom_call.1} parent=1 // pred_check
      _
    $region11: #{tpu_custom_call.1} parent=1 // pred_check_branch
      %16 = sbr.rel (0) target = $region13
    $region12: #{tpu_custom_call.1} parent=1 // pred_region
      _
    $region13: #{tpu_custom_call.1} parent=1 // pred_fallthru
      _
    // Predicated region
    $region14: #{tpu_custom_call.1} parent=1 // pred_check
      _
    $region15: #{tpu_custom_call.1} parent=1 // pred_check_branch
      %18 = sbr.rel (0) target = $region17
    $region16: #{tpu_custom_call.1} parent=1 // pred_region
      _
    $region17: #{tpu_custom_call.1} parent=1 // pred_fallthru
      _
    // Predicated region
    $region18: #{tpu_custom_call.1} parent=1 // pred_check
      _
    $region19: #{tpu_custom_call.1} parent=1 // pred_check_branch
      %20 = sbr.rel (0) target = $region21
    $region20: #{tpu_custom_call.1} parent=1 // pred_region
      _
    $region21: #{tpu_custom_call.1} parent=1 // pred_fallthru
      _
    %v22 = vld [vmem:[%s0] sm:$0xf]
    %v23 = vld [vmem:[%s0 + $0x4] sm:$0xf]
    %v24 = vld [vmem:[%s0 + $0x8] sm:$0xf]
    %v25 = vld [vmem:[%s0 + $0xc] sm:$0xf]
    %v26 = vld [vmem:[%s0 + $0x10] sm:$0xf]
    %v27 = vld [vmem:[%s0 + $0x14] sm:$0xf]
    %v28 = vld [vmem:[%s0 + $0x18] sm:$0xf]
    %v29 = vld [vmem:[%s0 + $0x1c] sm:$0xf]
    %v30 = vld [vmem:[%s0 + $0x20] sm:$0xf]
    %v31 = vld [vmem:[%s0 + $0x24] sm:$0xf]
    %v32 = vld [vmem:[%s0 + $0x28] sm:$0xf]
    %v33 = vld [vmem:[%s0 + $0x2c] sm:$0xf]
    %v34 = vld [vmem:[%s0 + $0x30] sm:$0xf]
    %v35 = vld [vmem:[%s0 + $0x34] sm:$0xf]
    %v36 = vld [vmem:[%s0 + $0x38] sm:$0xf]
    %v37 = vld [vmem:[%s0 + $0x3c] sm:$0xf]
    %v38 = vld [vmem:[%s1] sm:$0xf]
    %v39 = vld [vmem:[%s1 + $0x4] sm:$0xf]
    %v40 = vld [vmem:[%s2] sm:$0x1]
    %v42 = vlaneseq
    %v43 = vshrl.u32 %v42, 7
    %v44 = vsub.s32 0, %v43
    %v45 = vrot.slane %v40, %v44
    %v63 = vunpack.c.l.b16 %v22
    %v64 = vunpack.c.l.b16 %v23
    %v65 = vunpack.c.l.b16 %v24
    %v66 = vunpack.c.l.b16 %v25
    %v67 = vunpack.c.l.b16 %v26
    %v68 = vunpack.c.l.b16 %v27
    %v69 = vunpack.c.l.b16 %v28
    %v70 = vunpack.c.l.b16 %v29
    %v71 = vunpack.c.l.b16 %v30
    %v72 = vunpack.c.l.b16 %v31
    %v73 = vunpack.c.l.b16 %v32
    %v74 = vunpack.c.l.b16 %v33
    %v75 = vunpack.c.l.b16 %v34
    %v76 = vunpack.c.l.b16 %v35
    %v77 = vunpack.c.l.b16 %v36
    %v78 = vunpack.c.l.b16 %v37
    %v79 = vpack.c.b16 %v64, %v63
    %v80 = vpack.c.b16 %v66, %v65
    %v81 = vpack.c.b16 %v68, %v67
    %v82 = vpack.c.b16 %v70, %v69
    %v83 = vpack.c.b16 %v72, %v71
    %v84 = vpack.c.b16 %v74, %v73
    %v85 = vpack.c.b16 %v76, %v75
    %v86 = vpack.c.b16 %v78, %v77
    %v89 = vunpack.c.l.b16 %v38
    %v90 = vunpack.c.l.b16 %v39
    %v91 = vpack.c.b16 %v90, %v89
    %vm93 = vcmask 130048
    %v95 = vsel %vm93, %v79, 0
    %v98 = vsel %vm93, %v80, 0
    %v101 = vsel %vm93, %v81, 0
    %v104 = vsel %vm93, %v82, 0
    %v107 = vsel %vm93, %v83, 0
    %v110 = vsel %vm93, %v84, 0
    %v113 = vsel %vm93, %v85, 0
    %v116 = vsel %vm93, %v86, 0
    %118 = vmatprep.subr.bf16.mxu0 0
    %119 = vmatpush1.bf16.msra.mxu0 %v91
    %120 = vmatprep.subr.bf16.mxu0 0
    %121 = vmatpush1.bf16.msra.mxu0 0
    %122 = vmatprep.subr.bf16.mxu0 0
    %123 = vmatpush1.bf16.msra.mxu0 0
    %124 = vmatprep.subr.bf16.mxu0 0
    %125 = vmatpush1.bf16.msra.mxu0 0
    %126 = vmatprep.subr.bf16.mxu0 0
    %127 = vmatpush1.bf16.msra.mxu0 0
    %128 = vmatprep.subr.bf16.mxu0 0
    %129 = vmatpush1.bf16.msra.mxu0 0
    %130 = vmatprep.subr.bf16.mxu0 0
    %131 = vmatpush1.bf16.msra.mxu0 0
    %132 = vmatprep.subr.bf16.mxu0 0
    %133 = vmatpush1.bf16.msra.mxu0 0
    %134 = vmatprep.subr.bf16.mxu0 0
    %135 = vmatpush1.bf16.msra.mxu0 0
    %136 = vmatprep.subr.bf16.mxu0 0
    %137 = vmatpush1.bf16.msra.mxu0 0
    %138 = vmatprep.subr.bf16.mxu0 0
    %139 = vmatpush1.bf16.msra.mxu0 0
    %140 = vmatprep.subr.bf16.mxu0 0
    %141 = vmatpush1.bf16.msra.mxu0 0
    %142 = vmatprep.subr.bf16.mxu0 0
    %143 = vmatpush1.bf16.msra.mxu0 0
    %144 = vmatprep.subr.bf16.mxu0 0
    %145 = vmatpush1.bf16.msra.mxu0 0
    %146 = vmatprep.subr.bf16.mxu0 0
    %147 = vmatpush1.bf16.msra.mxu0 0
    %148 = vmatprep.subr.bf16.mxu0 0
    %149 = vmatpush1.bf16.msra.mxu0 0
    %150 = vmatprep.mubr.bf16.mxu0 0
    %151 = vmatmul.mubr.bf16.gmra.mrb[0].mxu0 %v95
    %v152 = vpop.f32.mrb[0].mxu0
    %v153 = vadd.f32 %v45, %v152
    %v154 = vpop.f32.mrb[0].mxu0
    %v155 = vpop.f32.mrb[0].mxu0
    %v156 = vadd.f32 %v45, %v155
    %v157 = vpop.f32.mrb[0].mxu0
    %158 = vmatprep.mubr.bf16.mxu0 0
    %159 = vmatmul.mubr.bf16.gmra.mrb[0].mxu0 %v98
    %v160 = vpop.f32.mrb[0].mxu0
    %v161 = vadd.f32 %v45, %v160
    %v162 = vpop.f32.mrb[0].mxu0
    %v163 = vpop.f32.mrb[0].mxu0
    %v164 = vadd.f32 %v45, %v163
    %v165 = vpop.f32.mrb[0].mxu0
    %166 = vmatprep.mubr.bf16.mxu0 0
    %167 = vmatmul.mubr.bf16.gmra.mrb[0].mxu0 %v101
    %v168 = vpop.f32.mrb[0].mxu0
    %v169 = vadd.f32 %v45, %v168
    %v170 = vpop.f32.mrb[0].mxu0
    %v171 = vpop.f32.mrb[0].mxu0
    %v172 = vadd.f32 %v45, %v171
    %v173 = vpop.f32.mrb[0].mxu0
    %174 = vmatprep.mubr.bf16.mxu0 0
    %175 = vmatmul.mubr.bf16.gmra.mrb[0].mxu0 %v104
    %v176 = vpop.f32.mrb[0].mxu0
    %v177 = vadd.f32 %v45, %v176
    %v178 = vpop.f32.mrb[0].mxu0
    %v179 = vpop.f32.mrb[0].mxu0
    %v180 = vadd.f32 %v45, %v179
    %v181 = vpop.f32.mrb[0].mxu0
    %182 = vmatprep.mubr.bf16.mxu0 0
    %183 = vmatmul.mubr.bf16.gmra.mrb[0].mxu0 %v107
    %v184 = vpop.f32.mrb[0].mxu0
    %v185 = vadd.f32 %v45, %v184
    %v186 = vpop.f32.mrb[0].mxu0
    %v187 = vpop.f32.mrb[0].mxu0
    %v188 = vadd.f32 %v45, %v187
    %v189 = vpop.f32.mrb[0].mxu0
    %190 = vmatprep.mubr.bf16.mxu0 0
    %191 = vmatmul.mubr.bf16.gmra.mrb[0].mxu0 %v110
    %v192 = vpop.f32.mrb[0].mxu0
    %v193 = vadd.f32 %v45, %v192
    %v194 = vpop.f32.mrb[0].mxu0
    %v195 = vpop.f32.mrb[0].mxu0
    %v196 = vadd.f32 %v45, %v195
    %v197 = vpop.f32.mrb[0].mxu0
    %198 = vmatprep.mubr.bf16.mxu0 0
    %199 = vmatmul.mubr.bf16.gmra.mrb[0].mxu0 %v113
    %v200 = vpop.f32.mrb[0].mxu0
    %v201 = vadd.f32 %v45, %v200
    %v202 = vpop.f32.mrb[0].mxu0
    %v203 = vpop.f32.mrb[0].mxu0
    %v204 = vadd.f32 %v45, %v203
    %v205 = vpop.f32.mrb[0].mxu0
    %206 = vmatprep.mubr.bf16.mxu0 0
    %207 = vmatmul.mubr.bf16.gmra.mrb[0].mxu0 %v116
    %v208 = vpop.f32.mrb[0].mxu0
    %v209 = vadd.f32 %v45, %v208
    %v210 = vpop.f32.mrb[0].mxu0
    %v211 = vpop.f32.mrb[0].mxu0
    %v212 = vadd.f32 %v45, %v211
    %v213 = vpop.f32.mrb[0].mxu0
    %214 = vdwg.mxu0
    %v215 = vmax.f32 %v153, 0.0
    %v216 = vmax.f32 %v156, 0.0
    %v217 = vmax.f32 %v161, 0.0
    %v218 = vmax.f32 %v164, 0.0
    %v219 = vmax.f32 %v169, 0.0
    %v220 = vmax.f32 %v172, 0.0
    %v221 = vmax.f32 %v177, 0.0
    %v222 = vmax.f32 %v180, 0.0
    %v223 = vmax.f32 %v185, 0.0
    %v224 = vmax.f32 %v188, 0.0
    %v225 = vmax.f32 %v193, 0.0
    %v226 = vmax.f32 %v196, 0.0
    %v227 = vmax.f32 %v201, 0.0
    %v228 = vmax.f32 %v204, 0.0
    %v229 = vmax.f32 %v209, 0.0
    %v230 = vmax.f32 %v212, 0.0
    %v231 = vpack.c.bf16 %v216, %v215
    %v232 = vpack.c.bf16 %v218, %v217
    %v233 = vpack.c.bf16 %v220, %v219
    %v234 = vpack.c.bf16 %v222, %v221
    %v235 = vpack.c.bf16 %v224, %v223
    %v236 = vpack.c.bf16 %v226, %v225
    %v237 = vpack.c.bf16 %v228, %v227
    %v238 = vpack.c.bf16 %v230, %v229
    %v239 = vld [vmem:[%s3] sm:$0xf]
    %v240 = vld [vmem:[%s3 + $0x4] sm:$0xf]
    %v241 = vld [vmem:[%s3 + $0x8] sm:$0xf]
    %v242 = vld [vmem:[%s3 + $0xc] sm:$0xf]
    %v243 = vld [vmem:[%s3 + $0x10] sm:$0xf]
    %v244 = vld [vmem:[%s3 + $0x14] sm:$0xf]
    %v245 = vld [vmem:[%s3 + $0x18] sm:$0xf]
    %v246 = vld [vmem:[%s3 + $0x1c] sm:$0xf]
    %v247 = vld [vmem:[%s3 + $0x20] sm:$0xf]
    %v248 = vld [vmem:[%s3 + $0x24] sm:$0xf]
    %v249 = vld [vmem:[%s3 + $0x28] sm:$0xf]
    %v250 = vld [vmem:[%s3 + $0x2c] sm:$0xf]
    %v251 = vld [vmem:[%s3 + $0x30] sm:$0xf]
    %v252 = vld [vmem:[%s3 + $0x34] sm:$0xf]
    %v253 = vld [vmem:[%s3 + $0x38] sm:$0xf]
    %v254 = vld [vmem:[%s3 + $0x3c] sm:$0xf]
    %v255 = vld [vmem:[%s4] sm:$0x1]
    %v257 = vlaneseq
    %v258 = vshrl.u32 %v257, 7
    %v259 = vsub.s32 0, %v258
    %v260 = vrot.slane %v255, %v259
    %v278 = vunpack.c.l.b16 %v239
    %v279 = vunpack.c.l.b16 %v240
    %v280 = vunpack.c.l.b16 %v241
    %v281 = vunpack.c.l.b16 %v242
    %v282 = vunpack.c.l.b16 %v243
    %v283 = vunpack.c.l.b16 %v244
    %v284 = vunpack.c.l.b16 %v245
    %v285 = vunpack.c.l.b16 %v246
    %v286 = vunpack.c.l.b16 %v247
    %v287 = vunpack.c.l.b16 %v248
    %v288 = vunpack.c.l.b16 %v249
    %v289 = vunpack.c.l.b16 %v250
    %v290 = vunpack.c.l.b16 %v251
    %v291 = vunpack.c.l.b16 %v252
    %v292 = vunpack.c.l.b16 %v253
    %v293 = vunpack.c.l.b16 %v254
    %v294 = vpack.c.b16 %v279, %v278
    %v295 = vpack.c.b16 %v281, %v280
    %v296 = vpack.c.b16 %v283, %v282
    %v297 = vpack.c.b16 %v285, %v284
    %v298 = vpack.c.b16 %v287, %v286
    %v299 = vpack.c.b16 %v289, %v288
    %v300 = vpack.c.b16 %v291, %v290
    %v301 = vpack.c.b16 %v293, %v292
    %310 = vmatprep.subr.bf16.mxu0 0
    %311 = vmatpush1.bf16.msra.mxu0 %v294
    %312 = vmatprep.subr.bf16.mxu0 0
    %313 = vmatpush1.bf16.msra.mxu0 %v295
    %314 = vmatprep.subr.bf16.mxu0 0
    %315 = vmatpush1.bf16.msra.mxu0 %v296
    %316 = vmatprep.subr.bf16.mxu0 0
    %317 = vmatpush1.bf16.msra.mxu0 %v297
    %318 = vmatprep.subr.bf16.mxu0 0
    %319 = vmatpush1.bf16.msra.mxu0 %v298
    %320 = vmatprep.subr.bf16.mxu0 0
    %321 = vmatpush1.bf16.msra.mxu0 %v299
    %322 = vmatprep.subr.bf16.mxu0 0
    %323 = vmatpush1.bf16.msra.mxu0 %v300
    %324 = vmatprep.subr.bf16.mxu0 0
    %325 = vmatpush1.bf16.msra.mxu0 %v301
    %326 = vmatprep.subr.bf16.mxu0 0
    %327 = vmatpush1.bf16.msra.mxu0 0
    %328 = vmatprep.subr.bf16.mxu0 0
    %329 = vmatpush1.bf16.msra.mxu0 0
    %330 = vmatprep.subr.bf16.mxu0 0
    %331 = vmatpush1.bf16.msra.mxu0 0
    %332 = vmatprep.subr.bf16.mxu0 0
    %333 = vmatpush1.bf16.msra.mxu0 0
    %334 = vmatprep.subr.bf16.mxu0 0
    %335 = vmatpush1.bf16.msra.mxu0 0
    %336 = vmatprep.subr.bf16.mxu0 0
    %337 = vmatpush1.bf16.msra.mxu0 0
    %338 = vmatprep.subr.bf16.mxu0 0
    %339 = vmatpush1.bf16.msra.mxu0 0
    %340 = vmatprep.subr.bf16.mxu0 0
    %341 = vmatpush1.bf16.msra.mxu0 0
    %342 = vmatprep.mubr.bf16.mxu0 0
    %343 = vmatmul.mubr.bf16.gmra.mrb[0].mxu0 %v231
    %v344 = vpop.f32.mrb[0].mxu0
    %v345 = vadd.f32 %v260, %v344
    %v346 = vpop.f32.mrb[0].mxu0
    %v347 = vpop.f32.mrb[0].mxu0
    %v348 = vadd.f32 %v260, %v347
    %v349 = vpop.f32.mrb[0].mxu0
    %350 = vmatprep.mubr.bf16.mxu0 0
    %351 = vmatmul.mubr.bf16.gmra.mrb[0].mxu0 %v232
    %v352 = vpop.f32.mrb[0].mxu0
    %v353 = vadd.f32 %v260, %v352
    %v354 = vpop.f32.mrb[0].mxu0
    %v355 = vpop.f32.mrb[0].mxu0
    %v356 = vadd.f32 %v260, %v355
    %v357 = vpop.f32.mrb[0].mxu0
    %358 = vmatprep.mubr.bf16.mxu0 0
    %359 = vmatmul.mubr.bf16.gmra.mrb[0].mxu0 %v233
    %v360 = vpop.f32.mrb[0].mxu0
    %v361 = vadd.f32 %v260, %v360
    %v362 = vpop.f32.mrb[0].mxu0
    %v363 = vpop.f32.mrb[0].mxu0
    %v364 = vadd.f32 %v260, %v363
    %v365 = vpop.f32.mrb[0].mxu0
    %366 = vmatprep.mubr.bf16.mxu0 0
    %367 = vmatmul.mubr.bf16.gmra.mrb[0].mxu0 %v234
    %v368 = vpop.f32.mrb[0].mxu0
    %v369 = vadd.f32 %v260, %v368
    %v370 = vpop.f32.mrb[0].mxu0
    %v371 = vpop.f32.mrb[0].mxu0
    %v372 = vadd.f32 %v260, %v371
    %v373 = vpop.f32.mrb[0].mxu0
    %374 = vmatprep.mubr.bf16.mxu0 0
    %375 = vmatmul.mubr.bf16.gmra.mrb[0].mxu0 %v235
    %v376 = vpop.f32.mrb[0].mxu0
    %v377 = vadd.f32 %v260, %v376
    %v378 = vpop.f32.mrb[0].mxu0
    %v379 = vpop.f32.mrb[0].mxu0
    %v380 = vadd.f32 %v260, %v379
    %v381 = vpop.f32.mrb[0].mxu0
    %382 = vmatprep.mubr.bf16.mxu0 0
    %383 = vmatmul.mubr.bf16.gmra.mrb[0].mxu0 %v236
    %v384 = vpop.f32.mrb[0].mxu0
    %v385 = vadd.f32 %v260, %v384
    %v386 = vpop.f32.mrb[0].mxu0
    %v387 = vpop.f32.mrb[0].mxu0
    %v388 = vadd.f32 %v260, %v387
    %v389 = vpop.f32.mrb[0].mxu0
    %390 = vmatprep.mubr.bf16.mxu0 0
    %391 = vmatmul.mubr.bf16.gmra.mrb[0].mxu0 %v237
    %v392 = vpop.f32.mrb[0].mxu0
    %v393 = vadd.f32 %v260, %v392
    %v394 = vpop.f32.mrb[0].mxu0
    %v395 = vpop.f32.mrb[0].mxu0
    %v396 = vadd.f32 %v260, %v395
    %v397 = vpop.f32.mrb[0].mxu0
    %398 = vmatprep.mubr.bf16.mxu0 0
    %399 = vmatmul.mubr.bf16.gmra.mrb[0].mxu0 %v238
    %v400 = vpop.f32.mrb[0].mxu0
    %v401 = vadd.f32 %v260, %v400
    %v402 = vpop.f32.mrb[0].mxu0
    %v403 = vpop.f32.mrb[0].mxu0
    %v404 = vadd.f32 %v260, %v403
    %v405 = vpop.f32.mrb[0].mxu0
    %406 = vdwg.mxu0
    %407 = vxpose.xlu0.b32.start [1/16] %v345, 128
    %408 = vxpose.xlu0.b32.cont [2/16] %v348, 128
    %409 = vxpose.xlu0.b32.cont [3/16] %v353, 128
    %410 = vxpose.xlu0.b32.cont [4/16] %v356, 128
    %411 = vxpose.xlu0.b32.cont [5/16] %v361, 128
    %412 = vxpose.xlu0.b32.cont [6/16] %v364, 128
    %413 = vxpose.xlu0.b32.cont [7/16] %v369, 128
    %414 = vxpose.xlu0.b32.cont [8/16] %v372, 128
    %415 = vxpose.xlu0.b32.cont [9/16] %v377, 128
    %416 = vxpose.xlu0.b32.cont [10/16] %v380, 128
    %417 = vxpose.xlu0.b32.cont [11/16] %v385, 128
    %418 = vxpose.xlu0.b32.cont [12/16] %v388, 128
    %419 = vxpose.xlu0.b32.cont [13/16] %v393, 128
    %420 = vxpose.xlu0.b32.cont [14/16] %v396, 128
    %421 = vxpose.xlu0.b32.cont [15/16] %v401, 128
    %422 = vxpose.xlu0.b32.end [16/16] %v404, 128
    %v423 = vpop.trf.xlu0
    %v424 = vpop.trf.xlu0
    %v425 = vpop.trf.xlu0
    %v426 = vpop.trf.xlu0
    %v427 = vpop.trf.xlu0
    %v428 = vpop.trf.xlu0
    %v429 = vpop.trf.xlu0
    %v430 = vpop.trf.xlu0
    %v431 = vpop.trf.xlu0
    %v432 = vpop.trf.xlu0
    %v433 = vpop.trf.xlu0
    %v434 = vpop.trf.xlu0
    %v435 = vpop.trf.xlu0
    %v436 = vpop.trf.xlu0
    %v437 = vpop.trf.xlu0
    %v438 = vpop.trf.xlu0
    %v439 = vpack.c.bf16 %v424, %v423
    %v441 = vunpack.c.l.b16 %v439
    %v442 = vunpack.c.h.b16 %v439
    %v443 = vpack.c.b16 %v441, %v441
    %v444 = vpack.c.b16 %v442, %v442
    %447 = vst [vmem:[#allocation2] sm:$0xf] %v443
    %448 = vst [vmem:[#allocation2 + $0x4] sm:$0xf] %v444
    // Predicated region
    $region22: #{tpu_custom_call.1} parent=1 // pred_check
      _
    $region23: #{tpu_custom_call.1} parent=1 // pred_check_branch
      %450 = sbr.rel (0) target = $region25
    $region24: #{tpu_custom_call.1} parent=1 // pred_region
      %s452 = ssub.s32 128, 128
      %453 = vsyncadd [#allocation3], %s452
      %s454 = sshll.u32 [#allocation2], 4
      %s455 = int_to_ptr.vmem [resolvable:$true] %s454
      %460 = dma.vmem_to_hbm [thread:$0]  %s455, 128, %s5, [#allocation3], 64, 64, 4
    $region25: #{tpu_custom_call.1} parent=1 // pred_fallthru
      _
    // Predicated region
    $region26: #{tpu_custom_call.1} parent=1 // pred_check
      _
    $region27: #{tpu_custom_call.1} parent=1 // pred_check_branch
      %462 = sbr.rel (0) target = $region29
    $region28: #{tpu_custom_call.1} parent=1 // pred_region
      %463 = dma.done [#allocation3], 128
    $region29: #{tpu_custom_call.1} parent=1 // pred_fallthru
      _
    %464 = vsyncpa [#allocation3], 1

</llo_original>
